<compile_context>
chip_gen: v5e
topology: v5e:2x2
jax: 0.10.0
libtpu: 0.0.40
codegen_flags: <defaults>
</compile_context>

<pallas_src>
import math

import jax
import jax.numpy as jnp
import numpy as np
from jax.experimental import pallas as pl
from jax.experimental.pallas import tpu as pltpu

# ---- problem sizes (small, consistent with the module) -------------------
BATCH = 2
SEQ = 8
INPUT_DIM = 32
EMBED_DIM = 32
NUM_HEADS = 4
HEAD_DIM = EMBED_DIM // NUM_HEADS


def mha_kernel(x_ref, wqkv_ref, bqkv_ref, wo_ref, bo_ref, o_ref):
    """Single invocation over the whole (flattened) problem.

    x_ref    : (B*S, D)   flattened input tokens
    wqkv_ref : (D, 3*E)   qkv weight, columns permuted to [Q | K | V] slabs,
                          Q columns pre-scaled by 1/sqrt(head_dim)
    bqkv_ref : (1, 3*E)   qkv bias (same permutation / scaling)
    wo_ref   : (E, E)     o_proj weight in [in, out] layout
    bo_ref   : (1, E)     o_proj bias
    o_ref    : (B*S, E)   flattened output tokens
    """
    x = x_ref[...]                                              # (BS, D)

    # qkv projection: one MXU matmul + one bias broadcast.
    qkv = jnp.dot(x, wqkv_ref[...], preferred_element_type=jnp.float32)
    qkv = qkv + bqkv_ref[...]                                   # (BS, 3E)

    q_all = qkv[:, :EMBED_DIM]                                  # (BS, E) pre-scaled
    k_all = qkv[:, EMBED_DIM:2 * EMBED_DIM]                     # (BS, E)
    v_all = qkv[:, 2 * EMBED_DIM:]                              # (BS, E)

    wo = wo_ref[...]                                            # (E, E)

    # TODO(synk): optional `mask` argument of the torch forward not wired in
    # (forward default is mask=None); return_attention path not implemented.
    o_acc = jnp.zeros((BATCH * SEQ, EMBED_DIM), jnp.float32)
    for h in range(NUM_HEADS):
        lo = h * HEAD_DIM
        hi = lo + HEAD_DIM
        # (BS, hd) -> (B, S, hd): leading-dim split only (layout-trivial).
        q = q_all[:, lo:hi].reshape(BATCH, SEQ, HEAD_DIM)
        k = k_all[:, lo:hi].reshape(BATCH, SEQ, HEAD_DIM)
        v = v_all[:, lo:hi].reshape(BATCH, SEQ, HEAD_DIM)

        # batched over the batch dim; scale already folded into W_q.
        logits = jnp.einsum("bqd,bkd->bqk", q, k,
                            preferred_element_type=jnp.float32)  # (B, S, S)
        m = jnp.max(logits, axis=-1, keepdims=True)
        p = jnp.exp(logits - m)
        denom = jnp.sum(p, axis=-1, keepdims=True)
        attn = p * pl.reciprocal(denom, approx=True)             # softmax(dim=-1)

        vals = jnp.einsum("bqk,bkd->bqd", attn, v,
                          preferred_element_type=jnp.float32)    # (B, S, hd)
        vals2 = vals.reshape(BATCH * SEQ, HEAD_DIM)              # (BS, hd)

        # Head merge folded into the output projection: no concatenate.
        o_acc = o_acc + jnp.dot(vals2, wo[lo:hi, :],
                                preferred_element_type=jnp.float32)

    o_ref[...] = (o_acc + bo_ref[...]).astype(o_ref.dtype)


def multihead_attention(x, w_qkv, b_qkv, w_o, b_o):
    """x: (B, S, D) float32.  Weights in torch layout:
    w_qkv (3E, D), b_qkv (3E,), w_o (E, E), b_o (E,)."""
    B, S, D = x.shape
    E = w_o.shape[0]
    H, hd = NUM_HEADS, HEAD_DIM

    # [in, out] layouts so the kernel computes x @ W + b.
    w_qkv_t = jnp.asarray(w_qkv).T                  # (D, 3E)
    w_o_t = jnp.asarray(w_o).T                      # (E, E)

    # Permute qkv output columns: per-head interleaved [q_h|k_h|v_h] ->
    # contiguous slabs [Q_allheads | K_allheads | V_allheads].
    # old column = h*3*hd + j*hd + m  ->  new column = j*E + h*hd + m
    perm = np.arange(3 * E).reshape(H, 3, hd).transpose(1, 0, 2).reshape(-1)
    w_qkv_p = w_qkv_t[:, perm]
    b_qkv_p = jnp.asarray(b_qkv)[perm]

    # Fold 1/sqrt(head_dim) into the Q slab (columns [0, E)).
    scale = 1.0 / math.sqrt(hd)
    w_qkv_p = w_qkv_p.at[:, :E].multiply(scale)
    b_qkv_p = b_qkv_p.at[:E].multiply(scale)

    x2d = x.reshape(B * S, D)

    out2d = pl.pallas_call(
        mha_kernel,
        out_shape=jax.ShapeDtypeStruct((B * S, E), jnp.float32),
        grid_spec=pltpu.PrefetchScalarGridSpec(
            num_scalar_prefetch=0,
            grid=(1,),
            in_specs=[
                pl.BlockSpec((B * S, D), lambda i: (0, 0)),
                pl.BlockSpec((D, 3 * E), lambda i: (0, 0)),
                pl.BlockSpec((1, 3 * E), lambda i: (0, 0)),
                pl.BlockSpec((E, E), lambda i: (0, 0)),
                pl.BlockSpec((1, E), lambda i: (0, 0)),
            ],
            out_specs=pl.BlockSpec((B * S, E), lambda i: (0, 0)),
        ),
        compiler_params=pltpu.CompilerParams(
            dimension_semantics=("arbitrary",)),
    )(x2d, w_qkv_p, b_qkv_p.reshape(1, -1), w_o_t, jnp.asarray(b_o).reshape(1, -1))

    return out2d.reshape(B, S, E)


def _xavier_uniform(key, fan_out, fan_in):
    # matches nn.init.xavier_uniform_ on a (fan_out, fan_in) weight
    bound = math.sqrt(6.0 / (fan_in + fan_out))
    return jax.random.uniform(key, (fan_out, fan_in), jnp.float32, -bound, bound)


def reference_mha(x, w_qkv, b_qkv, w_o, b_o):
    """Pure-JAX reference mirroring the PyTorch forward (torch-layout weights)."""
    B, S, _ = x.shape
    qkv = x @ w_qkv.T + b_qkv                                   # (B, S, 3E)
    qkv = qkv.reshape(B, S, NUM_HEADS, 3 * HEAD_DIM)
    qkv = jnp.transpose(qkv, (0, 2, 1, 3))                      # (B, H, S, 3hd)
    q, k, v = jnp.split(qkv, 3, axis=-1)
    logits = jnp.einsum("bhqd,bhkd->bhqk", q, k) / math.sqrt(HEAD_DIM)
    attn = jax.nn.softmax(logits, axis=-1)
    vals = jnp.einsum("bhqk,bhkd->bhqd", attn, v)
    vals = jnp.transpose(vals, (0, 2, 1, 3)).reshape(B, S, EMBED_DIM)
    return vals @ w_o.T + b_o


if __name__ == "__main__":
    key = jax.random.PRNGKey(0)
    k_x, k_wqkv, k_wo = jax.random.split(key, 3)

    # deterministic parameter init (same shapes as the torch module)
    w_qkv = _xavier_uniform(k_wqkv, 3 * EMBED_DIM, INPUT_DIM)   # (3E, D) torch layout
    b_qkv = jnp.zeros((3 * EMBED_DIM,), jnp.float32)
    w_o = _xavier_uniform(k_wo, EMBED_DIM, EMBED_DIM)           # (E, E) torch layout
    b_o = jnp.zeros((EMBED_DIM,), jnp.float32)

    x = jax.random.normal(k_x, (BATCH, SEQ, INPUT_DIM), jnp.float32)

    out = multihead_attention(x, w_qkv, b_qkv, w_o, b_o)
    out = jax.block_until_ready(out)

    ref = reference_mha(x, w_qkv, b_qkv, w_o, b_o)
    # tolerance relaxed slightly for pl.reciprocal(approx=True) in the softmax
    np.testing.assert_allclose(np.asarray(out), np.asarray(ref),
                               rtol=2e-3, atol=2e-3)

    print("KERNEL_OK")
</pallas_src>

<mosaic_0001>
module attributes {stable_mosaic.version = 11 : i64} {
  func.func @mha_kernel(%arg0: i32, %arg1: memref<16x32xf32, #tpu.memory_space<vmem>>, %arg2: memref<32x96xf32, #tpu.memory_space<vmem>>, %arg3: memref<1x96xf32, #tpu.memory_space<vmem>>, %arg4: memref<32x32xf32, #tpu.memory_space<vmem>>, %arg5: memref<1x32xf32, #tpu.memory_space<vmem>>, %arg6: memref<16x32xf32, #tpu.memory_space<vmem>>) attributes {dimension_semantics = [#tpu.dimension_semantics<arbitrary>], iteration_bounds = array<i64: 1>, scalar_prefetch = 0 : i64, scratch_operands = 0 : i64, tpu.core_type = #tpu.core_type<tc>, window_params = [{pipeline_mode = #tpu.pipeline_mode<synchronous>, transform_indices = @transform_0, window_bounds = array<i64: 16, 32>}, {pipeline_mode = #tpu.pipeline_mode<synchronous>, transform_indices = @transform_1, window_bounds = array<i64: 32, 96>}, {pipeline_mode = #tpu.pipeline_mode<synchronous>, transform_indices = @transform_2, window_bounds = array<i64: 1, 96>}, {pipeline_mode = #tpu.pipeline_mode<synchronous>, transform_indices = @transform_3, window_bounds = array<i64: 32, 32>}, {pipeline_mode = #tpu.pipeline_mode<synchronous>, transform_indices = @transform_4, window_bounds = array<i64: 1, 32>}, {pipeline_mode = #tpu.pipeline_mode<synchronous>, transform_indices = @transform_5, window_bounds = array<i64: 16, 32>}]} {
    %c0 = arith.constant 0 : index
    %c0_0 = arith.constant 0 : index
    %0 = vector.load %arg1[%c0, %c0_0] : memref<16x32xf32, #tpu.memory_space<vmem>>, vector<16x32xf32>
    %c0_1 = arith.constant 0 : index
    %c0_2 = arith.constant 0 : index
    %1 = vector.load %arg2[%c0_1, %c0_2] : memref<32x96xf32, #tpu.memory_space<vmem>>, vector<32x96xf32>
    %cst = arith.constant dense<0.000000e+00> : vector<16x96xf32>
    %2 = tpu.matmul %0, %1, %cst {dimension_numbers = #tpu.dot_dimension_numbers<[1], [0], [0], [1], [0, 0, 1, 1], [], []>} : vector<16x32xf32>, vector<32x96xf32>, vector<16x96xf32> -> vector<16x96xf32>
    %c0_3 = arith.constant 0 : index
    %c0_4 = arith.constant 0 : index
    %3 = vector.load %arg3[%c0_3, %c0_4] : memref<1x96xf32, #tpu.memory_space<vmem>>, vector<1x96xf32>
    %4 = vector.broadcast %3 : vector<1x96xf32> to vector<16x96xf32>
    %5 = arith.addf %2, %4 : vector<16x96xf32>
    %6 = vector.extract_strided_slice %5 {offsets = [0, 0], sizes = [16, 32], strides = [1, 1]} : vector<16x96xf32> to vector<16x32xf32>
    %7 = vector.extract_strided_slice %5 {offsets = [0, 32], sizes = [16, 32], strides = [1, 1]} : vector<16x96xf32> to vector<16x32xf32>
    %8 = vector.extract_strided_slice %5 {offsets = [0, 64], sizes = [16, 32], strides = [1, 1]} : vector<16x96xf32> to vector<16x32xf32>
    %c0_5 = arith.constant 0 : index
    %c0_6 = arith.constant 0 : index
    %9 = vector.load %arg4[%c0_5, %c0_6] : memref<32x32xf32, #tpu.memory_space<vmem>>, vector<32x32xf32>
    %cst_7 = arith.constant 0.000000e+00 : f32
    %10 = vector.broadcast %cst_7 : f32 to vector<16x32xf32>
    %11 = vector.extract_strided_slice %6 {offsets = [0, 0], sizes = [16, 8], strides = [1, 1]} : vector<16x32xf32> to vector<16x8xf32>
    %12 = vector.shape_cast %11 : vector<16x8xf32> to vector<2x8x8xf32>
    %13 = vector.extract_strided_slice %7 {offsets = [0, 0], sizes = [16, 8], strides = [1, 1]} : vector<16x32xf32> to vector<16x8xf32>
    %14 = vector.shape_cast %13 : vector<16x8xf32> to vector<2x8x8xf32>
    %15 = vector.extract_strided_slice %8 {offsets = [0, 0], sizes = [16, 8], strides = [1, 1]} : vector<16x32xf32> to vector<16x8xf32>
    %16 = vector.shape_cast %15 : vector<16x8xf32> to vector<2x8x8xf32>
    "tpu.trace_start"() <{level = 10 : i32, message = "bqd,bkd->bqk"}> : () -> ()
    %cst_8 = arith.constant dense<0.000000e+00> : vector<2x8x8xf32>
    %17 = tpu.matmul %12, %14, %cst_8 {dimension_numbers = #tpu.dot_dimension_numbers<[2], [2], [1], [1], [0, 0, 0, 1, 1, 1], [0], [0]>} : vector<2x8x8xf32>, vector<2x8x8xf32>, vector<2x8x8xf32> -> vector<2x8x8xf32>
    "tpu.trace_stop"() : () -> ()
    %cst_9 = arith.constant dense<0xFF800000> : vector<2x8xf32>
    %18 = vector.multi_reduction <maximumf>, %17, %cst_9 [2] : vector<2x8x8xf32> to vector<2x8xf32>
    %19 = vector.shape_cast %18 : vector<2x8xf32> to vector<2x8x1xf32>
    %20 = vector.broadcast %19 : vector<2x8x1xf32> to vector<2x8x8xf32>
    %21 = arith.subf %17, %20 : vector<2x8x8xf32>
    %22 = math.exp %21 : vector<2x8x8xf32>
    %cst_10 = arith.constant dense<0.000000e+00> : vector<2x8xf32>
    %23 = vector.multi_reduction <add>, %22, %cst_10 [2] : vector<2x8x8xf32> to vector<2x8xf32>
    %24 = vector.shape_cast %23 : vector<2x8xf32> to vector<2x8x1xf32>
    %25 = tpu.reciprocal %24 {approx = true} : vector<2x8x1xf32> -> vector<2x8x1xf32>
    %26 = vector.broadcast %25 : vector<2x8x1xf32> to vector<2x8x8xf32>
    %27 = arith.mulf %22, %26 : vector<2x8x8xf32>
    "tpu.trace_start"() <{level = 10 : i32, message = "bqk,bkd->bqd"}> : () -> ()
    %cst_11 = arith.constant dense<0.000000e+00> : vector<2x8x8xf32>
    %28 = tpu.matmul %27, %16, %cst_11 {dimension_numbers = #tpu.dot_dimension_numbers<[2], [1], [1], [2], [0, 0, 0, 1, 1, 2], [0], [0]>} : vector<2x8x8xf32>, vector<2x8x8xf32>, vector<2x8x8xf32> -> vector<2x8x8xf32>
    "tpu.trace_stop"() : () -> ()
    %29 = vector.shape_cast %28 : vector<2x8x8xf32> to vector<16x8xf32>
    %30 = vector.extract_strided_slice %9 {offsets = [0, 0], sizes = [8, 32], strides = [1, 1]} : vector<32x32xf32> to vector<8x32xf32>
    %cst_12 = arith.constant dense<0.000000e+00> : vector<16x32xf32>
    %31 = tpu.matmul %29, %30, %cst_12 {dimension_numbers = #tpu.dot_dimension_numbers<[1], [0], [0], [1], [0, 0, 1, 1], [], []>} : vector<16x8xf32>, vector<8x32xf32>, vector<16x32xf32> -> vector<16x32xf32>
    %32 = arith.addf %10, %31 : vector<16x32xf32>
    %33 = vector.extract_strided_slice %6 {offsets = [0, 8], sizes = [16, 8], strides = [1, 1]} : vector<16x32xf32> to vector<16x8xf32>
    %34 = vector.shape_cast %33 : vector<16x8xf32> to vector<2x8x8xf32>
    %35 = vector.extract_strided_slice %7 {offsets = [0, 8], sizes = [16, 8], strides = [1, 1]} : vector<16x32xf32> to vector<16x8xf32>
    %36 = vector.shape_cast %35 : vector<16x8xf32> to vector<2x8x8xf32>
    %37 = vector.extract_strided_slice %8 {offsets = [0, 8], sizes = [16, 8], strides = [1, 1]} : vector<16x32xf32> to vector<16x8xf32>
    %38 = vector.shape_cast %37 : vector<16x8xf32> to vector<2x8x8xf32>
    "tpu.trace_start"() <{level = 10 : i32, message = "bqd,bkd->bqk"}> : () -> ()
    %cst_13 = arith.constant dense<0.000000e+00> : vector<2x8x8xf32>
    %39 = tpu.matmul %34, %36, %cst_13 {dimension_numbers = #tpu.dot_dimension_numbers<[2], [2], [1], [1], [0, 0, 0, 1, 1, 1], [0], [0]>} : vector<2x8x8xf32>, vector<2x8x8xf32>, vector<2x8x8xf32> -> vector<2x8x8xf32>
    "tpu.trace_stop"() : () -> ()
    %cst_14 = arith.constant dense<0xFF800000> : vector<2x8xf32>
    %40 = vector.multi_reduction <maximumf>, %39, %cst_14 [2] : vector<2x8x8xf32> to vector<2x8xf32>
    %41 = vector.shape_cast %40 : vector<2x8xf32> to vector<2x8x1xf32>
    %42 = vector.broadcast %41 : vector<2x8x1xf32> to vector<2x8x8xf32>
    %43 = arith.subf %39, %42 : vector<2x8x8xf32>
    %44 = math.exp %43 : vector<2x8x8xf32>
    %cst_15 = arith.constant dense<0.000000e+00> : vector<2x8xf32>
    %45 = vector.multi_reduction <add>, %44, %cst_15 [2] : vector<2x8x8xf32> to vector<2x8xf32>
    %46 = vector.shape_cast %45 : vector<2x8xf32> to vector<2x8x1xf32>
    %47 = tpu.reciprocal %46 {approx = true} : vector<2x8x1xf32> -> vector<2x8x1xf32>
    %48 = vector.broadcast %47 : vector<2x8x1xf32> to vector<2x8x8xf32>
    %49 = arith.mulf %44, %48 : vector<2x8x8xf32>
    "tpu.trace_start"() <{level = 10 : i32, message = "bqk,bkd->bqd"}> : () -> ()
    %cst_16 = arith.constant dense<0.000000e+00> : vector<2x8x8xf32>
    %50 = tpu.matmul %49, %38, %cst_16 {dimension_numbers = #tpu.dot_dimension_numbers<[2], [1], [1], [2], [0, 0, 0, 1, 1, 2], [0], [0]>} : vector<2x8x8xf32>, vector<2x8x8xf32>, vector<2x8x8xf32> -> vector<2x8x8xf32>
    "tpu.trace_stop"() : () -> ()
    %51 = vector.shape_cast %50 : vector<2x8x8xf32> to vector<16x8xf32>
    %52 = vector.extract_strided_slice %9 {offsets = [8, 0], sizes = [8, 32], strides = [1, 1]} : vector<32x32xf32> to vector<8x32xf32>
    %cst_17 = arith.constant dense<0.000000e+00> : vector<16x32xf32>
    %53 = tpu.matmul %51, %52, %cst_17 {dimension_numbers = #tpu.dot_dimension_numbers<[1], [0], [0], [1], [0, 0, 1, 1], [], []>} : vector<16x8xf32>, vector<8x32xf32>, vector<16x32xf32> -> vector<16x32xf32>
    %54 = arith.addf %32, %53 : vector<16x32xf32>
    %55 = vector.extract_strided_slice %6 {offsets = [0, 16], sizes = [16, 8], strides = [1, 1]} : vector<16x32xf32> to vector<16x8xf32>
    %56 = vector.shape_cast %55 : vector<16x8xf32> to vector<2x8x8xf32>
    %57 = vector.extract_strided_slice %7 {offsets = [0, 16], sizes = [16, 8], strides = [1, 1]} : vector<16x32xf32> to vector<16x8xf32>
    %58 = vector.shape_cast %57 : vector<16x8xf32> to vector<2x8x8xf32>
    %59 = vector.extract_strided_slice %8 {offsets = [0, 16], sizes = [16, 8], strides = [1, 1]} : vector<16x32xf32> to vector<16x8xf32>
    %60 = vector.shape_cast %59 : vector<16x8xf32> to vector<2x8x8xf32>
    "tpu.trace_start"() <{level = 10 : i32, message = "bqd,bkd->bqk"}> : () -> ()
    %cst_18 = arith.constant dense<0.000000e+00> : vector<2x8x8xf32>
    %61 = tpu.matmul %56, %58, %cst_18 {dimension_numbers = #tpu.dot_dimension_numbers<[2], [2], [1], [1], [0, 0, 0, 1, 1, 1], [0], [0]>} : vector<2x8x8xf32>, vector<2x8x8xf32>, vector<2x8x8xf32> -> vector<2x8x8xf32>
    "tpu.trace_stop"() : () -> ()
    %cst_19 = arith.constant dense<0xFF800000> : vector<2x8xf32>
    %62 = vector.multi_reduction <maximumf>, %61, %cst_19 [2] : vector<2x8x8xf32> to vector<2x8xf32>
    %63 = vector.shape_cast %62 : vector<2x8xf32> to vector<2x8x1xf32>
    %64 = vector.broadcast %63 : vector<2x8x1xf32> to vector<2x8x8xf32>
    %65 = arith.subf %61, %64 : vector<2x8x8xf32>
    %66 = math.exp %65 : vector<2x8x8xf32>
    %cst_20 = arith.constant dense<0.000000e+00> : vector<2x8xf32>
    %67 = vector.multi_reduction <add>, %66, %cst_20 [2] : vector<2x8x8xf32> to vector<2x8xf32>
    %68 = vector.shape_cast %67 : vector<2x8xf32> to vector<2x8x1xf32>
    %69 = tpu.reciprocal %68 {approx = true} : vector<2x8x1xf32> -> vector<2x8x1xf32>
    %70 = vector.broadcast %69 : vector<2x8x1xf32> to vector<2x8x8xf32>
    %71 = arith.mulf %66, %70 : vector<2x8x8xf32>
    "tpu.trace_start"() <{level = 10 : i32, message = "bqk,bkd->bqd"}> : () -> ()
    %cst_21 = arith.constant dense<0.000000e+00> : vector<2x8x8xf32>
    %72 = tpu.matmul %71, %60, %cst_21 {dimension_numbers = #tpu.dot_dimension_numbers<[2], [1], [1], [2], [0, 0, 0, 1, 1, 2], [0], [0]>} : vector<2x8x8xf32>, vector<2x8x8xf32>, vector<2x8x8xf32> -> vector<2x8x8xf32>
    "tpu.trace_stop"() : () -> ()
    %73 = vector.shape_cast %72 : vector<2x8x8xf32> to vector<16x8xf32>
    %74 = vector.extract_strided_slice %9 {offsets = [16, 0], sizes = [8, 32], strides = [1, 1]} : vector<32x32xf32> to vector<8x32xf32>
    %cst_22 = arith.constant dense<0.000000e+00> : vector<16x32xf32>
    %75 = tpu.matmul %73, %74, %cst_22 {dimension_numbers = #tpu.dot_dimension_numbers<[1], [0], [0], [1], [0, 0, 1, 1], [], []>} : vector<16x8xf32>, vector<8x32xf32>, vector<16x32xf32> -> vector<16x32xf32>
    %76 = arith.addf %54, %75 : vector<16x32xf32>
    %77 = vector.extract_strided_slice %6 {offsets = [0, 24], sizes = [16, 8], strides = [1, 1]} : vector<16x32xf32> to vector<16x8xf32>
    %78 = vector.shape_cast %77 : vector<16x8xf32> to vector<2x8x8xf32>
    %79 = vector.extract_strided_slice %7 {offsets = [0, 24], sizes = [16, 8], strides = [1, 1]} : vector<16x32xf32> to vector<16x8xf32>
    %80 = vector.shape_cast %79 : vector<16x8xf32> to vector<2x8x8xf32>
    %81 = vector.extract_strided_slice %8 {offsets = [0, 24], sizes = [16, 8], strides = [1, 1]} : vector<16x32xf32> to vector<16x8xf32>
    %82 = vector.shape_cast %81 : vector<16x8xf32> to vector<2x8x8xf32>
    "tpu.trace_start"() <{level = 10 : i32, message = "bqd,bkd->bqk"}> : () -> ()
    %cst_23 = arith.constant dense<0.000000e+00> : vector<2x8x8xf32>
    %83 = tpu.matmul %78, %80, %cst_23 {dimension_numbers = #tpu.dot_dimension_numbers<[2], [2], [1], [1], [0, 0, 0, 1, 1, 1], [0], [0]>} : vector<2x8x8xf32>, vector<2x8x8xf32>, vector<2x8x8xf32> -> vector<2x8x8xf32>
    "tpu.trace_stop"() : () -> ()
    %cst_24 = arith.constant dense<0xFF800000> : vector<2x8xf32>
    %84 = vector.multi_reduction <maximumf>, %83, %cst_24 [2] : vector<2x8x8xf32> to vector<2x8xf32>
    %85 = vector.shape_cast %84 : vector<2x8xf32> to vector<2x8x1xf32>
    %86 = vector.broadcast %85 : vector<2x8x1xf32> to vector<2x8x8xf32>
    %87 = arith.subf %83, %86 : vector<2x8x8xf32>
    %88 = math.exp %87 : vector<2x8x8xf32>
    %cst_25 = arith.constant dense<0.000000e+00> : vector<2x8xf32>
    %89 = vector.multi_reduction <add>, %88, %cst_25 [2] : vector<2x8x8xf32> to vector<2x8xf32>
    %90 = vector.shape_cast %89 : vector<2x8xf32> to vector<2x8x1xf32>
    %91 = tpu.reciprocal %90 {approx = true} : vector<2x8x1xf32> -> vector<2x8x1xf32>
    %92 = vector.broadcast %91 : vector<2x8x1xf32> to vector<2x8x8xf32>
    %93 = arith.mulf %88, %92 : vector<2x8x8xf32>
    "tpu.trace_start"() <{level = 10 : i32, message = "bqk,bkd->bqd"}> : () -> ()
    %cst_26 = arith.constant dense<0.000000e+00> : vector<2x8x8xf32>
    %94 = tpu.matmul %93, %82, %cst_26 {dimension_numbers = #tpu.dot_dimension_numbers<[2], [1], [1], [2], [0, 0, 0, 1, 1, 2], [0], [0]>} : vector<2x8x8xf32>, vector<2x8x8xf32>, vector<2x8x8xf32> -> vector<2x8x8xf32>
    "tpu.trace_stop"() : () -> ()
    %95 = vector.shape_cast %94 : vector<2x8x8xf32> to vector<16x8xf32>
    %96 = vector.extract_strided_slice %9 {offsets = [24, 0], sizes = [8, 32], strides = [1, 1]} : vector<32x32xf32> to vector<8x32xf32>
    %cst_27 = arith.constant dense<0.000000e+00> : vector<16x32xf32>
    %97 = tpu.matmul %95, %96, %cst_27 {dimension_numbers = #tpu.dot_dimension_numbers<[1], [0], [0], [1], [0, 0, 1, 1], [], []>} : vector<16x8xf32>, vector<8x32xf32>, vector<16x32xf32> -> vector<16x32xf32>
    %98 = arith.addf %76, %97 : vector<16x32xf32>
    %c0_28 = arith.constant 0 : index
    %c0_29 = arith.constant 0 : index
    %99 = vector.load %arg5[%c0_28, %c0_29] : memref<1x32xf32, #tpu.memory_space<vmem>>, vector<1x32xf32>
    %100 = vector.broadcast %99 : vector<1x32xf32> to vector<16x32xf32>
    %101 = arith.addf %98, %100 : vector<16x32xf32>
    %c0_30 = arith.constant 0 : index
    %c0_31 = arith.constant 0 : index
    %102 = vector.load %arg6[%c0_30, %c0_31] : memref<16x32xf32, #tpu.memory_space<vmem>>, vector<16x32xf32>
    tpu.vector_store %arg6[%c0_30, %c0_31], %101 {strides = array<i32>} : memref<16x32xf32, #tpu.memory_space<vmem>>, vector<16x32xf32>,
    return
  }
  func.func @transform_0(%arg0: i32) -> (i32, i32) {
    %c0_i32 = arith.constant 0 : i32
    %c0_i32_0 = arith.constant 0 : i32
    %c0_i32_1 = arith.constant 0 : i32
    return %c0_i32, %c0_i32_0 : i32, i32
  }
  func.func @transform_1(%arg0: i32) -> (i32, i32) {
    %c0_i32 = arith.constant 0 : i32
    %c0_i32_0 = arith.constant 0 : i32
    %c0_i32_1 = arith.constant 0 : i32
    return %c0_i32, %c0_i32_0 : i32, i32
  }
  func.func @transform_2(%arg0: i32) -> (i32, i32) {
    %c0_i32 = arith.constant 0 : i32
    %c0_i32_0 = arith.constant 0 : i32
    %c0_i32_1 = arith.constant 0 : i32
    return %c0_i32, %c0_i32_0 : i32, i32
  }
  func.func @transform_3(%arg0: i32) -> (i32, i32) {
    %c0_i32 = arith.constant 0 : i32
    %c0_i32_0 = arith.constant 0 : i32
    %c0_i32_1 = arith.constant 0 : i32
    return %c0_i32, %c0_i32_0 : i32, i32
  }
  func.func @transform_4(%arg0: i32) -> (i32, i32) {
    %c0_i32 = arith.constant 0 : i32
    %c0_i32_0 = arith.constant 0 : i32
    %c0_i32_1 = arith.constant 0 : i32
    return %c0_i32, %c0_i32_0 : i32, i32
  }
  func.func @transform_5(%arg0: i32) -> (i32, i32) {
    %c0_i32 = arith.constant 0 : i32
    %c0_i32_0 = arith.constant 0 : i32
    %c0_i32_1 = arith.constant 0 : i32
    return %c0_i32, %c0_i32_0 : i32, i32
  }
}

</mosaic_0001>

<llo_original>
// kernel: tpu_custom_call.1
$region0: #{tpu_custom_call.1}
  #allocation0 [shape = 'u32[]', space=smem, size = 0x4, offset = 0x4, fixed_abs, tag = 'smem constant byte address 0x4 - core index']
  #allocation1 [shape = 'u32[72,128]{1,0:T(1,128)}', space=vmem, size = 0x9000, scoped, tag = 'internal scratch']
  %s0 = inlined_call_operand.hbm [shape: f32[16,32], index: 0, kind: input, shape index: {}]
  %s1 = inlined_call_operand.hbm [shape: f32[32,96], index: 1, kind: input, shape index: {}]
  %s2 = inlined_call_operand.vmem [shape: f32[1,96], index: 2, kind: input, shape index: {}]
  %s3 = inlined_call_operand.hbm [shape: f32[32,32], index: 3, kind: input, shape index: {}]
  %s4 = inlined_call_operand.vmem [shape: f32[1,32], index: 4, kind: input, shape index: {}]
  %s5 = inlined_call_operand.hbm [shape: f32[16,32], index: 5, kind: output, shape index: {}]
  %s6 = sld [smem:[#allocation0]]
  $region42: #{tpu_custom_call.1} parent=0
    _
  %s8 = ssub.s32 1, %s6
  %s9 = scalar_select 0, %s8, %s6
  $region1: #{tpu_custom_call.1} parent=0
    #allocation2 [shape = 'u8[8192]{0}', space=vmem, size = 0x2000, scoped, tag = 'input window, operand 0, single buffered']
    #allocation3 [shape = 's32[1]{0}', space=sflag, size = 0x4, scoped, tag = 'scoped memory for tpu_custom_call.1']
    #allocation4 [shape = 's32[1]{0}', space=sflag, size = 0x4, scoped, tag = 'scoped memory for tpu_custom_call.1']
    #allocation5 [shape = 'u8[16384]{0}', space=vmem, size = 0x4000, scoped, tag = 'input window, operand 1, single buffered']
    #allocation6 [shape = 's32[1]{0}', space=sflag, size = 0x4, scoped, tag = 'scoped memory for tpu_custom_call.1']
    #allocation7 [shape = 'u8[16384]{0}', space=vmem, size = 0x4000, scoped, tag = 'input window, operand 3, single buffered']
    #allocation8 [shape = 'u8[8192]{0}', space=vmem, size = 0x2000, scoped, tag = 'output window, operand 0, single buffered']
    %10 = vsyncpa [#allocation3], 0
    %11 = vsyncpa [#allocation6], 0
    %12 = vsyncpa [#allocation4], 0
    // Predicated region
    $region2: #{tpu_custom_call.1} parent=1 // pred_check
      _
    $region3: #{tpu_custom_call.1} parent=1 // pred_check_branch
      %14 = sbr.rel (0) target = $region5
    $region4: #{tpu_custom_call.1} parent=1 // pred_region
      %16 = vsyncadd [#allocation3], 0
      %s17 = sshll.u32 %s0, 4
      %s18 = int_to_ptr.hbm [resolvable:$true] %s17
      %s19 = sshll.u32 [#allocation2], 4
      %s20 = int_to_ptr.vmem [resolvable:$true] %s19
      %25 = dma.hbm_to_vmem [thread:$0]  %s18, 256, %s20, [#allocation3], 128, 128, 8
    $region5: #{tpu_custom_call.1} parent=1 // pred_fallthru
      _
    // Predicated region
    $region6: #{tpu_custom_call.1} parent=1 // pred_check
      _
    $region7: #{tpu_custom_call.1} parent=1 // pred_check_branch
      %27 = sbr.rel (0) target = $region9
    $region8: #{tpu_custom_call.1} parent=1 // pred_region
      %29 = vsyncadd [#allocation6], 0
      %s30 = sshll.u32 %s1, 4
      %s31 = int_to_ptr.hbm [resolvable:$true] %s30
      %s32 = sshll.u32 [#allocation5], 4
      %s33 = int_to_ptr.vmem [resolvable:$true] %s32
      %38 = dma.hbm_to_vmem [thread:$0]  %s31, 512, %s33, [#allocation6], 128, 128, 8
    $region9: #{tpu_custom_call.1} parent=1 // pred_fallthru
      _
    // Predicated region
    $region10: #{tpu_custom_call.1} parent=1 // pred_check
      _
    $region11: #{tpu_custom_call.1} parent=1 // pred_check_branch
      %40 = sbr.rel (0) target = $region13
    $region12: #{tpu_custom_call.1} parent=1 // pred_region
      _
    $region13: #{tpu_custom_call.1} parent=1 // pred_fallthru
      _
    // Predicated region
    $region14: #{tpu_custom_call.1} parent=1 // pred_check
      _
    $region15: #{tpu_custom_call.1} parent=1 // pred_check_branch
      %42 = sbr.rel (0) target = $region17
    $region16: #{tpu_custom_call.1} parent=1 // pred_region
      %44 = vsyncadd [#allocation6], 0
      %s45 = sshll.u32 %s3, 4
      %s46 = int_to_ptr.hbm [resolvable:$true] %s45
      %s47 = sshll.u32 [#allocation7], 4
      %s48 = int_to_ptr.vmem [resolvable:$true] %s47
      %53 = dma.hbm_to_vmem [thread:$0]  %s46, 512, %s48, [#allocation6], 128, 128, 8
    $region17: #{tpu_custom_call.1} parent=1 // pred_fallthru
      _
    // Predicated region
    $region18: #{tpu_custom_call.1} parent=1 // pred_check
      _
    $region19: #{tpu_custom_call.1} parent=1 // pred_check_branch
      %55 = sbr.rel (0) target = $region21
    $region20: #{tpu_custom_call.1} parent=1 // pred_region
      _
    $region21: #{tpu_custom_call.1} parent=1 // pred_fallthru
      _
    // Predicated region
    $region22: #{tpu_custom_call.1} parent=1 // pred_check
      _
    $region23: #{tpu_custom_call.1} parent=1 // pred_check_branch
      %57 = sbr.rel (0) target = $region25
    $region24: #{tpu_custom_call.1} parent=1 // pred_region
      %59 = dma.done [#allocation3], 256
    $region25: #{tpu_custom_call.1} parent=1 // pred_fallthru
      _
    // Predicated region
    $region26: #{tpu_custom_call.1} parent=1 // pred_check
      _
    $region27: #{tpu_custom_call.1} parent=1 // pred_check_branch
      %61 = sbr.rel (0) target = $region29
    $region28: #{tpu_custom_call.1} parent=1 // pred_region
      %63 = dma.done [#allocation6], 512
    $region29: #{tpu_custom_call.1} parent=1 // pred_fallthru
      _
    // Predicated region
    $region30: #{tpu_custom_call.1} parent=1 // pred_check
      _
    $region31: #{tpu_custom_call.1} parent=1 // pred_check_branch
      %65 = sbr.rel (0) target = $region33
    $region32: #{tpu_custom_call.1} parent=1 // pred_region
      %67 = dma.done [#allocation6], 512
    $region33: #{tpu_custom_call.1} parent=1 // pred_fallthru
      _
    %v68 = vld [vmem:[#allocation2] sm:$0xff]
    %v69 = vld [vmem:[#allocation2 + $0x8] sm:$0xff]
    %v70 = vld [vmem:[#allocation5] sm:$0xff]
    %v71 = vld [vmem:[#allocation5 + $0x8] sm:$0xff]
    %v72 = vld [vmem:[#allocation5 + $0x10] sm:$0xff]
    %v73 = vld [vmem:[#allocation5 + $0x18] sm:$0xff]
    %v74 = vld [vmem:[%s2] sm:$0x1]
    %v76 = vperm.slane %v74, 0
    %vm78 = vcmask 261120
    %v80 = vsel %vm78, %v68, 0
    %v83 = vsel %vm78, %v69, 0
    %85 = vmatpush.msra.mxu0 0.0
    %86 = vmatpush.msra.mxu0 0.0
    %87 = vmatpush.msra.mxu0 0.0
    %88 = vmatpush.msra.mxu0 0.0
    %89 = vmatpush.msra.mxu0 0.0
    %90 = vmatpush.msra.mxu0 0.0
    %91 = vmatpush.msra.mxu0 0.0
    %92 = vmatpush.msra.mxu0 0.0
    %93 = vmatpush.msra.mxu0 0.0
    %94 = vmatpush.msra.mxu0 0.0
    %95 = vmatpush.msra.mxu0 0.0
    %96 = vmatpush.msra.mxu0 0.0
    %97 = vmatpush.msra.mxu0 %v73
    %98 = vmatpush.msra.mxu0 %v72
    %99 = vmatpush.msra.mxu0 %v71
    %100 = vmatpush.msra.mxu0 %v70
    %101 = vmatmul.f32.gmra.mxu0 %v80
    %v102 = vpop.f32.mrf.mxu0
    %v103 = vadd.f32 %v76, %v102
    %104 = vmatmul.f32.gmra.mxu0 %v83
    %v105 = vpop.f32.mrf.mxu0
    %v106 = vadd.f32 %v76, %v105
    %107 = vdwg.mxu0
    %v108 = vld [vmem:[#allocation7] sm:$0xff]
    %v109 = vld [vmem:[#allocation7 + $0x8] sm:$0xff]
    %v110 = vld [vmem:[#allocation7 + $0x10] sm:$0xff]
    %v111 = vld [vmem:[#allocation7 + $0x18] sm:$0xff]
    %113 = vrot.lane.b32.xlu0 %v103, 96
    %v114 = vpop.permute.xlu0 %113
    %vm115 = vcmask 64512
    %v116 = vsel %vm115, %v103, 0
    %v118 = vsel %vm115, %v114, 0
    %120 = vmatpush.xpose.msra.mxu0 0.0
    %121 = vmatpush.xpose.msra.mxu0 0.0
    %122 = vmatpush.xpose.msra.mxu0 0.0
    %123 = vmatpush.xpose.msra.mxu0 0.0
    %124 = vmatpush.xpose.msra.mxu0 0.0
    %125 = vmatpush.xpose.msra.mxu0 0.0
    %126 = vmatpush.xpose.msra.mxu0 0.0
    %127 = vmatpush.xpose.msra.mxu0 0.0
    %128 = vmatpush.xpose.msra.mxu0 0.0
    %129 = vmatpush.xpose.msra.mxu0 0.0
    %130 = vmatpush.xpose.msra.mxu0 0.0
    %131 = vmatpush.xpose.msra.mxu0 0.0
    %132 = vmatpush.xpose.msra.mxu0 0.0
    %133 = vmatpush.xpose.msra.mxu0 0.0
    %134 = vmatpush.xpose.msra.mxu0 0.0
    %135 = vmatpush.xpose.msra.mxu0 %v118
    %136 = vmatmul.f32.gmra.mxu0 %v116
    %v137 = vpop.f32.mrf.mxu0
    %v138 = vadd.f32 0.0, %v137
    %139 = vdwg.mxu0
    %141 = vrot.lane.b32.xlu0 %v106, 96
    %v142 = vpop.permute.xlu0 %141
    %v143 = vsel %vm115, %v106, 0
    %v145 = vsel %vm115, %v142, 0
    %147 = vmatpush.xpose.msra.mxu0 0.0
    %148 = vmatpush.xpose.msra.mxu0 0.0
    %149 = vmatpush.xpose.msra.mxu0 0.0
    %150 = vmatpush.xpose.msra.mxu0 0.0
    %151 = vmatpush.xpose.msra.mxu0 0.0
    %152 = vmatpush.xpose.msra.mxu0 0.0
    %153 = vmatpush.xpose.msra.mxu0 0.0
    %154 = vmatpush.xpose.msra.mxu0 0.0
    %155 = vmatpush.xpose.msra.mxu0 0.0
    %156 = vmatpush.xpose.msra.mxu0 0.0
    %157 = vmatpush.xpose.msra.mxu0 0.0
    %158 = vmatpush.xpose.msra.mxu0 0.0
    %159 = vmatpush.xpose.msra.mxu0 0.0
    %160 = vmatpush.xpose.msra.mxu0 0.0
    %161 = vmatpush.xpose.msra.mxu0 0.0
    %162 = vmatpush.xpose.msra.mxu0 %v145
    %163 = vmatmul.f32.gmra.mxu0 %v143
    %v164 = vpop.f32.mrf.mxu0
    %v165 = vadd.f32 0.0, %v164
    %166 = vdwg.mxu0
    %v167 = vsel %vm115, %v138, -inf
    %168 = vmax.xlane.f32.xlu0 %v167
    %v169 = vpop.xlane.xlu0 %168
    %v170 = vsel %vm115, %v165, -inf
    %171 = vmax.xlane.f32.xlu0 %v170
    %v172 = vpop.xlane.xlu0 %171
    %v173 = vsub.f32 %v138, %v169
    %v174 = vsub.f32 %v165, %v172
    %v175 = vmul.f32 %v173, 1.442695
    %v176 = vpow.pop %v175
    %v177 = vmul.f32 %v174, 1.442695
    %v178 = vpow.pop %v177
    %v179 = vsel %vm115, %v176, 0.0
    %180 = vadd.xlane.f32.xlu0 %v179
    %v181 = vpop.xlane.xlu0 %180
    %v182 = vsel %vm115, %v178, 0.0
    %183 = vadd.xlane.f32.xlu0 %v182
    %v184 = vpop.xlane.xlu0 %183
    %v185 = vrcp.pop %v181
    %v186 = vrcp.pop %v184
    %v187 = vmul.f32 %v176, %v185
    %v188 = vmul.f32 %v178, %v186
    %189 = vrot.lane.b32.xlu0 %v103, 64
    %v190 = vpop.permute.xlu0 %189
    %v193 = vsel %vm115, %v187, 0
    %195 = vmatpush.msra.mxu0 0.0
    %196 = vmatpush.msra.mxu0 0.0
    %197 = vmatpush.msra.mxu0 0.0
    %198 = vmatpush.msra.mxu0 0.0
    %199 = vmatpush.msra.mxu0 0.0
    %200 = vmatpush.msra.mxu0 0.0
    %201 = vmatpush.msra.mxu0 0.0
    %202 = vmatpush.msra.mxu0 0.0
    %203 = vmatpush.msra.mxu0 0.0
    %204 = vmatpush.msra.mxu0 0.0
    %205 = vmatpush.msra.mxu0 0.0
    %206 = vmatpush.msra.mxu0 0.0
    %207 = vmatpush.msra.mxu0 0.0
    %208 = vmatpush.msra.mxu0 0.0
    %209 = vmatpush.msra.mxu0 0.0
    %210 = vmatpush.msra.mxu0 %v190
    %211 = vmatmul.f32.gmra.mxu0 %v193
    %v212 = vpop.f32.mrf.mxu0
    %v213 = vadd.f32 0.0, %v212
    %214 = vdwg.mxu0
    %215 = vrot.lane.b32.xlu0 %v106, 64
    %v216 = vpop.permute.xlu0 %215
    %v219 = vsel %vm115, %v188, 0
    %221 = vmatpush.msra.mxu0 0.0
    %222 = vmatpush.msra.mxu0 0.0
    %223 = vmatpush.msra.mxu0 0.0
    %224 = vmatpush.msra.mxu0 0.0
    %225 = vmatpush.msra.mxu0 0.0
    %226 = vmatpush.msra.mxu0 0.0
    %227 = vmatpush.msra.mxu0 0.0
    %228 = vmatpush.msra.mxu0 0.0
    %229 = vmatpush.msra.mxu0 0.0
    %230 = vmatpush.msra.mxu0 0.0
    %231 = vmatpush.msra.mxu0 0.0
    %232 = vmatpush.msra.mxu0 0.0
    %233 = vmatpush.msra.mxu0 0.0
    %234 = vmatpush.msra.mxu0 0.0
    %235 = vmatpush.msra.mxu0 0.0
    %236 = vmatpush.msra.mxu0 %v216
    %237 = vmatmul.f32.gmra.mxu0 %v219
    %v238 = vpop.f32.mrf.mxu0
    %v239 = vadd.f32 0.0, %v238
    %240 = vdwg.mxu0
    %241 = vrot.lane.b32.xlu0 %v103, 120
    %v242 = vpop.permute.xlu0 %241
    %243 = vrot.lane.b32.xlu0 %v103, 88
    %v244 = vpop.permute.xlu0 %243
    %v245 = vsel %vm115, %v242, 0
    %v247 = vsel %vm115, %v244, 0
    %249 = vmatpush.xpose.msra.mxu0 0.0
    %250 = vmatpush.xpose.msra.mxu0 0.0
    %251 = vmatpush.xpose.msra.mxu0 0.0
    %252 = vmatpush.xpose.msra.mxu0 0.0
    %253 = vmatpush.xpose.msra.mxu0 0.0
    %254 = vmatpush.xpose.msra.mxu0 0.0
    %255 = vmatpush.xpose.msra.mxu0 0.0
    %256 = vmatpush.xpose.msra.mxu0 0.0
    %257 = vmatpush.xpose.msra.mxu0 0.0
    %258 = vmatpush.xpose.msra.mxu0 0.0
    %259 = vmatpush.xpose.msra.mxu0 0.0
    %260 = vmatpush.xpose.msra.mxu0 0.0
    %261 = vmatpush.xpose.msra.mxu0 0.0
    %262 = vmatpush.xpose.msra.mxu0 0.0
    %263 = vmatpush.xpose.msra.mxu0 0.0
    %264 = vmatpush.xpose.msra.mxu0 %v247
    %265 = vmatmul.f32.gmra.mxu0 %v245
    %v266 = vpop.f32.mrf.mxu0
    %v267 = vadd.f32 0.0, %v266
    %268 = vdwg.mxu0
    %269 = vrot.lane.b32.xlu0 %v106, 120
    %v270 = vpop.permute.xlu0 %269
    %271 = vrot.lane.b32.xlu0 %v106, 88
    %v272 = vpop.permute.xlu0 %271
    %v273 = vsel %vm115, %v270, 0
    %v275 = vsel %vm115, %v272, 0
    %277 = vmatpush.xpose.msra.mxu0 0.0
    %278 = vmatpush.xpose.msra.mxu0 0.0
    %279 = vmatpush.xpose.msra.mxu0 0.0
    %280 = vmatpush.xpose.msra.mxu0 0.0
    %281 = vmatpush.xpose.msra.mxu0 0.0
    %282 = vmatpush.xpose.msra.mxu0 0.0
    %283 = vmatpush.xpose.msra.mxu0 0.0
    %284 = vmatpush.xpose.msra.mxu0 0.0
    %285 = vmatpush.xpose.msra.mxu0 0.0
    %286 = vmatpush.xpose.msra.mxu0 0.0
    %287 = vmatpush.xpose.msra.mxu0 0.0
    %288 = vmatpush.xpose.msra.mxu0 0.0
    %289 = vmatpush.xpose.msra.mxu0 0.0
    %290 = vmatpush.xpose.msra.mxu0 0.0
    %291 = vmatpush.xpose.msra.mxu0 0.0
    %292 = vmatpush.xpose.msra.mxu0 %v275
    %293 = vmatmul.f32.gmra.mxu0 %v273
    %v294 = vpop.f32.mrf.mxu0
    %v295 = vadd.f32 0.0, %v294
    %296 = vdwg.mxu0
    %v297 = vsel %vm115, %v267, -inf
    %298 = vmax.xlane.f32.xlu0 %v297
    %v299 = vpop.xlane.xlu0 %298
    %v300 = vsel %vm115, %v295, -inf
    %301 = vmax.xlane.f32.xlu0 %v300
    %v302 = vpop.xlane.xlu0 %301
    %v303 = vsub.f32 %v267, %v299
    %v304 = vsub.f32 %v295, %v302
    %v305 = vmul.f32 %v303, 1.442695
    %v306 = vpow.pop %v305
    %v307 = vmul.f32 %v304, 1.442695
    %v308 = vpow.pop %v307
    %v309 = vsel %vm115, %v306, 0.0
    %310 = vadd.xlane.f32.xlu0 %v309
    %v311 = vpop.xlane.xlu0 %310
    %v312 = vsel %vm115, %v308, 0.0
    %313 = vadd.xlane.f32.xlu0 %v312
    %v314 = vpop.xlane.xlu0 %313
    %v315 = vrcp.pop %v311
    %v316 = vrcp.pop %v314
    %v317 = vmul.f32 %v306, %v315
    %v318 = vmul.f32 %v308, %v316
    %319 = vrot.lane.b32.xlu0 %v103, 56
    %v320 = vpop.permute.xlu0 %319
    %v323 = vsel %vm115, %v317, 0
    %325 = vmatpush.msra.mxu0 0.0
    %326 = vmatpush.msra.mxu0 0.0
    %327 = vmatpush.msra.mxu0 0.0
    %328 = vmatpush.msra.mxu0 0.0
    %329 = vmatpush.msra.mxu0 0.0
    %330 = vmatpush.msra.mxu0 0.0
    %331 = vmatpush.msra.mxu0 0.0
    %332 = vmatpush.msra.mxu0 0.0
    %333 = vmatpush.msra.mxu0 0.0
    %334 = vmatpush.msra.mxu0 0.0
    %335 = vmatpush.msra.mxu0 0.0
    %336 = vmatpush.msra.mxu0 0.0
    %337 = vmatpush.msra.mxu0 0.0
    %338 = vmatpush.msra.mxu0 0.0
    %339 = vmatpush.msra.mxu0 0.0
    %340 = vmatpush.msra.mxu0 %v320
    %341 = vmatmul.f32.gmra.mxu0 %v323
    %v342 = vpop.f32.mrf.mxu0
    %v343 = vadd.f32 0.0, %v342
    %344 = vdwg.mxu0
    %345 = vrot.lane.b32.xlu0 %v106, 56
    %v346 = vpop.permute.xlu0 %345
    %v349 = vsel %vm115, %v318, 0
    %351 = vmatpush.msra.mxu0 0.0
    %352 = vmatpush.msra.mxu0 0.0
    %353 = vmatpush.msra.mxu0 0.0
    %354 = vmatpush.msra.mxu0 0.0
    %355 = vmatpush.msra.mxu0 0.0
    %356 = vmatpush.msra.mxu0 0.0
    %357 = vmatpush.msra.mxu0 0.0
    %358 = vmatpush.msra.mxu0 0.0
    %359 = vmatpush.msra.mxu0 0.0
    %360 = vmatpush.msra.mxu0 0.0
    %361 = vmatpush.msra.mxu0 0.0
    %362 = vmatpush.msra.mxu0 0.0
    %363 = vmatpush.msra.mxu0 0.0
    %364 = vmatpush.msra.mxu0 0.0
    %365 = vmatpush.msra.mxu0 0.0
    %366 = vmatpush.msra.mxu0 %v346
    %367 = vmatmul.f32.gmra.mxu0 %v349
    %v368 = vpop.f32.mrf.mxu0
    %v369 = vadd.f32 0.0, %v368
    %370 = vdwg.mxu0
    %v372 = vsel %vm115, %v343, 0
    %v375 = vsel %vm115, %v369, 0
    %377 = vmatpush.msra.mxu0 0.0
    %378 = vmatpush.msra.mxu0 0.0
    %379 = vmatpush.msra.mxu0 0.0
    %380 = vmatpush.msra.mxu0 0.0
    %381 = vmatpush.msra.mxu0 0.0
    %382 = vmatpush.msra.mxu0 0.0
    %383 = vmatpush.msra.mxu0 0.0
    %384 = vmatpush.msra.mxu0 0.0
    %385 = vmatpush.msra.mxu0 0.0
    %386 = vmatpush.msra.mxu0 0.0
    %387 = vmatpush.msra.mxu0 0.0
    %388 = vmatpush.msra.mxu0 0.0
    %389 = vmatpush.msra.mxu0 0.0
    %390 = vmatpush.msra.mxu0 0.0
    %391 = vmatpush.msra.mxu0 0.0
    %392 = vmatpush.msra.mxu0 %v109
    %393 = vmatmul.f32.gmra.mxu0 %v372
    %v394 = vpop.f32.mrf.mxu0
    %v395 = vadd.f32 0.0, %v394
    %396 = vmatmul.f32.gmra.mxu0 %v375
    %v397 = vpop.f32.mrf.mxu0
    %v398 = vadd.f32 0.0, %v397
    %399 = vdwg.mxu0
    %v401 = vsel %vm115, %v213, 0
    %v404 = vsel %vm115, %v239, 0
    %406 = vmatpush.msra.mxu0 0.0
    %407 = vmatpush.msra.mxu0 0.0
    %408 = vmatpush.msra.mxu0 0.0
    %409 = vmatpush.msra.mxu0 0.0
    %410 = vmatpush.msra.mxu0 0.0
    %411 = vmatpush.msra.mxu0 0.0
    %412 = vmatpush.msra.mxu0 0.0
    %413 = vmatpush.msra.mxu0 0.0
    %414 = vmatpush.msra.mxu0 0.0
    %415 = vmatpush.msra.mxu0 0.0
    %416 = vmatpush.msra.mxu0 0.0
    %417 = vmatpush.msra.mxu0 0.0
    %418 = vmatpush.msra.mxu0 0.0
    %419 = vmatpush.msra.mxu0 0.0
    %420 = vmatpush.msra.mxu0 0.0
    %421 = vmatpush.msra.mxu0 %v108
    %422 = vmatmul.f32.gmra.mxu0 %v401
    %v423 = vpop.f32.mrf.mxu0
    %v424 = vadd.f32 %v395, %v423
    %425 = vmatmul.f32.gmra.mxu0 %v404
    %v426 = vpop.f32.mrf.mxu0
    %v427 = vadd.f32 %v398, %v426
    %428 = vdwg.mxu0
    %429 = vrot.lane.b32.xlu0 %v103, 112
    %v430 = vpop.permute.xlu0 %429
    %431 = vrot.lane.b32.xlu0 %v103, 80
    %v432 = vpop.permute.xlu0 %431
    %v433 = vsel %vm115, %v430, 0
    %v435 = vsel %vm115, %v432, 0
    %437 = vmatpush.xpose.msra.mxu0 0.0
    %438 = vmatpush.xpose.msra.mxu0 0.0
    %439 = vmatpush.xpose.msra.mxu0 0.0
    %440 = vmatpush.xpose.msra.mxu0 0.0
    %441 = vmatpush.xpose.msra.mxu0 0.0
    %442 = vmatpush.xpose.msra.mxu0 0.0
    %443 = vmatpush.xpose.msra.mxu0 0.0
    %444 = vmatpush.xpose.msra.mxu0 0.0
    %445 = vmatpush.xpose.msra.mxu0 0.0
    %446 = vmatpush.xpose.msra.mxu0 0.0
    %447 = vmatpush.xpose.msra.mxu0 0.0
    %448 = vmatpush.xpose.msra.mxu0 0.0
    %449 = vmatpush.xpose.msra.mxu0 0.0
    %450 = vmatpush.xpose.msra.mxu0 0.0
    %451 = vmatpush.xpose.msra.mxu0 0.0
    %452 = vmatpush.xpose.msra.mxu0 %v435
    %453 = vmatmul.f32.gmra.mxu0 %v433
    %v454 = vpop.f32.mrf.mxu0
    %v455 = vadd.f32 0.0, %v454
    %456 = vdwg.mxu0
    %457 = vrot.lane.b32.xlu0 %v106, 112
    %v458 = vpop.permute.xlu0 %457
    %459 = vrot.lane.b32.xlu0 %v106, 80
    %v460 = vpop.permute.xlu0 %459
    %v461 = vsel %vm115, %v458, 0
    %v463 = vsel %vm115, %v460, 0
    %465 = vmatpush.xpose.msra.mxu0 0.0
    %466 = vmatpush.xpose.msra.mxu0 0.0
    %467 = vmatpush.xpose.msra.mxu0 0.0
    %468 = vmatpush.xpose.msra.mxu0 0.0
    %469 = vmatpush.xpose.msra.mxu0 0.0
    %470 = vmatpush.xpose.msra.mxu0 0.0
    %471 = vmatpush.xpose.msra.mxu0 0.0
    %472 = vmatpush.xpose.msra.mxu0 0.0
    %473 = vmatpush.xpose.msra.mxu0 0.0
    %474 = vmatpush.xpose.msra.mxu0 0.0
    %475 = vmatpush.xpose.msra.mxu0 0.0
    %476 = vmatpush.xpose.msra.mxu0 0.0
    %477 = vmatpush.xpose.msra.mxu0 0.0
    %478 = vmatpush.xpose.msra.mxu0 0.0
    %479 = vmatpush.xpose.msra.mxu0 0.0
    %480 = vmatpush.xpose.msra.mxu0 %v463
    %481 = vmatmul.f32.gmra.mxu0 %v461
    %v482 = vpop.f32.mrf.mxu0
    %v483 = vadd.f32 0.0, %v482
    %484 = vdwg.mxu0
    %v485 = vsel %vm115, %v455, -inf
    %486 = vmax.xlane.f32.xlu0 %v485
    %v487 = vpop.xlane.xlu0 %486
    %v488 = vsel %vm115, %v483, -inf
    %489 = vmax.xlane.f32.xlu0 %v488
    %v490 = vpop.xlane.xlu0 %489
    %v491 = vsub.f32 %v455, %v487
    %v492 = vsub.f32 %v483, %v490
    %v493 = vmul.f32 %v491, 1.442695
    %v494 = vpow.pop %v493
    %v495 = vmul.f32 %v492, 1.442695
    %v496 = vpow.pop %v495
    %v497 = vsel %vm115, %v494, 0.0
    %498 = vadd.xlane.f32.xlu0 %v497
    %v499 = vpop.xlane.xlu0 %498
    %v500 = vsel %vm115, %v496, 0.0
    %501 = vadd.xlane.f32.xlu0 %v500
    %v502 = vpop.xlane.xlu0 %501
    %v503 = vrcp.pop %v499
    %v504 = vrcp.pop %v502
    %v505 = vmul.f32 %v494, %v503
    %v506 = vmul.f32 %v496, %v504
    %507 = vrot.lane.b32.xlu0 %v103, 48
    %v508 = vpop.permute.xlu0 %507
    %v511 = vsel %vm115, %v505, 0
    %513 = vmatpush.msra.mxu0 0.0
    %514 = vmatpush.msra.mxu0 0.0
    %515 = vmatpush.msra.mxu0 0.0
    %516 = vmatpush.msra.mxu0 0.0
    %517 = vmatpush.msra.mxu0 0.0
    %518 = vmatpush.msra.mxu0 0.0
    %519 = vmatpush.msra.mxu0 0.0
    %520 = vmatpush.msra.mxu0 0.0
    %521 = vmatpush.msra.mxu0 0.0
    %522 = vmatpush.msra.mxu0 0.0
    %523 = vmatpush.msra.mxu0 0.0
    %524 = vmatpush.msra.mxu0 0.0
    %525 = vmatpush.msra.mxu0 0.0
    %526 = vmatpush.msra.mxu0 0.0
    %527 = vmatpush.msra.mxu0 0.0
    %528 = vmatpush.msra.mxu0 %v508
    %529 = vmatmul.f32.gmra.mxu0 %v511
    %v530 = vpop.f32.mrf.mxu0
    %v531 = vadd.f32 0.0, %v530
    %532 = vdwg.mxu0
    %533 = vrot.lane.b32.xlu0 %v106, 48
    %v534 = vpop.permute.xlu0 %533
    %v537 = vsel %vm115, %v506, 0
    %539 = vmatpush.msra.mxu0 0.0
    %540 = vmatpush.msra.mxu0 0.0
    %541 = vmatpush.msra.mxu0 0.0
    %542 = vmatpush.msra.mxu0 0.0
    %543 = vmatpush.msra.mxu0 0.0
    %544 = vmatpush.msra.mxu0 0.0
    %545 = vmatpush.msra.mxu0 0.0
    %546 = vmatpush.msra.mxu0 0.0
    %547 = vmatpush.msra.mxu0 0.0
    %548 = vmatpush.msra.mxu0 0.0
    %549 = vmatpush.msra.mxu0 0.0
    %550 = vmatpush.msra.mxu0 0.0
    %551 = vmatpush.msra.mxu0 0.0
    %552 = vmatpush.msra.mxu0 0.0
    %553 = vmatpush.msra.mxu0 0.0
    %554 = vmatpush.msra.mxu0 %v534
    %555 = vmatmul.f32.gmra.mxu0 %v537
    %v556 = vpop.f32.mrf.mxu0
    %v557 = vadd.f32 0.0, %v556
    %558 = vdwg.mxu0
    %v560 = vsel %vm115, %v531, 0
    %v563 = vsel %vm115, %v557, 0
    %565 = vmatpush.msra.mxu0 0.0
    %566 = vmatpush.msra.mxu0 0.0
    %567 = vmatpush.msra.mxu0 0.0
    %568 = vmatpush.msra.mxu0 0.0
    %569 = vmatpush.msra.mxu0 0.0
    %570 = vmatpush.msra.mxu0 0.0
    %571 = vmatpush.msra.mxu0 0.0
    %572 = vmatpush.msra.mxu0 0.0
    %573 = vmatpush.msra.mxu0 0.0
    %574 = vmatpush.msra.mxu0 0.0
    %575 = vmatpush.msra.mxu0 0.0
    %576 = vmatpush.msra.mxu0 0.0
    %577 = vmatpush.msra.mxu0 0.0
    %578 = vmatpush.msra.mxu0 0.0
    %579 = vmatpush.msra.mxu0 0.0
    %580 = vmatpush.msra.mxu0 %v110
    %581 = vmatmul.f32.gmra.mxu0 %v560
    %v582 = vpop.f32.mrf.mxu0
    %v583 = vadd.f32 0.0, %v582
    %584 = vmatmul.f32.gmra.mxu0 %v563
    %v585 = vpop.f32.mrf.mxu0
    %v586 = vadd.f32 0.0, %v585
    %587 = vdwg.mxu0
    %v588 = vadd.f32 %v424, %v583
    %v589 = vadd.f32 %v427, %v586
    %590 = vrot.lane.b32.xlu0 %v103, 104
    %v591 = vpop.permute.xlu0 %590
    %592 = vrot.lane.b32.xlu0 %v103, 72
    %v593 = vpop.permute.xlu0 %592
    %v594 = vsel %vm115, %v591, 0
    %v596 = vsel %vm115, %v593, 0
    %598 = vmatpush.xpose.msra.mxu0 0.0
    %599 = vmatpush.xpose.msra.mxu0 0.0
    %600 = vmatpush.xpose.msra.mxu0 0.0
    %601 = vmatpush.xpose.msra.mxu0 0.0
    %602 = vmatpush.xpose.msra.mxu0 0.0
    %603 = vmatpush.xpose.msra.mxu0 0.0
    %604 = vmatpush.xpose.msra.mxu0 0.0
    %605 = vmatpush.xpose.msra.mxu0 0.0
    %606 = vmatpush.xpose.msra.mxu0 0.0
    %607 = vmatpush.xpose.msra.mxu0 0.0
    %608 = vmatpush.xpose.msra.mxu0 0.0
    %609 = vmatpush.xpose.msra.mxu0 0.0
    %610 = vmatpush.xpose.msra.mxu0 0.0
    %611 = vmatpush.xpose.msra.mxu0 0.0
    %612 = vmatpush.xpose.msra.mxu0 0.0
    %613 = vmatpush.xpose.msra.mxu0 %v596
    %614 = vmatmul.f32.gmra.mxu0 %v594
    %v615 = vpop.f32.mrf.mxu0
    %v616 = vadd.f32 0.0, %v615
    %617 = vdwg.mxu0
    %618 = vrot.lane.b32.xlu0 %v106, 104
    %v619 = vpop.permute.xlu0 %618
    %620 = vrot.lane.b32.xlu0 %v106, 72
    %v621 = vpop.permute.xlu0 %620
    %v622 = vsel %vm115, %v619, 0
    %v624 = vsel %vm115, %v621, 0
    %626 = vmatpush.xpose.msra.mxu0 0.0
    %627 = vmatpush.xpose.msra.mxu0 0.0
    %628 = vmatpush.xpose.msra.mxu0 0.0
    %629 = vmatpush.xpose.msra.mxu0 0.0
    %630 = vmatpush.xpose.msra.mxu0 0.0
    %631 = vmatpush.xpose.msra.mxu0 0.0
    %632 = vmatpush.xpose.msra.mxu0 0.0
    %633 = vmatpush.xpose.msra.mxu0 0.0
    %634 = vmatpush.xpose.msra.mxu0 0.0
    %635 = vmatpush.xpose.msra.mxu0 0.0
    %636 = vmatpush.xpose.msra.mxu0 0.0
    %637 = vmatpush.xpose.msra.mxu0 0.0
    %638 = vmatpush.xpose.msra.mxu0 0.0
    %639 = vmatpush.xpose.msra.mxu0 0.0
    %640 = vmatpush.xpose.msra.mxu0 0.0
    %641 = vmatpush.xpose.msra.mxu0 %v624
    %642 = vmatmul.f32.gmra.mxu0 %v622
    %v643 = vpop.f32.mrf.mxu0
    %v644 = vadd.f32 0.0, %v643
    %645 = vdwg.mxu0
    %v646 = vsel %vm115, %v616, -inf
    %647 = vmax.xlane.f32.xlu0 %v646
    %v648 = vpop.xlane.xlu0 %647
    %v649 = vsel %vm115, %v644, -inf
    %650 = vmax.xlane.f32.xlu0 %v649
    %v651 = vpop.xlane.xlu0 %650
    %v652 = vsub.f32 %v616, %v648
    %v653 = vsub.f32 %v644, %v651
    %v654 = vmul.f32 %v652, 1.442695
    %v655 = vpow.pop %v654
    %v656 = vmul.f32 %v653, 1.442695
    %v657 = vpow.pop %v656
    %v658 = vsel %vm115, %v655, 0.0
    %659 = vadd.xlane.f32.xlu0 %v658
    %v660 = vpop.xlane.xlu0 %659
    %v661 = vsel %vm115, %v657, 0.0
    %662 = vadd.xlane.f32.xlu0 %v661
    %v663 = vpop.xlane.xlu0 %662
    %v664 = vrcp.pop %v660
    %v665 = vrcp.pop %v663
    %v666 = vmul.f32 %v655, %v664
    %v667 = vmul.f32 %v657, %v665
    %668 = vrot.lane.b32.xlu0 %v103, 40
    %v669 = vpop.permute.xlu0 %668
    %v672 = vsel %vm115, %v666, 0
    %674 = vmatpush.msra.mxu0 0.0
    %675 = vmatpush.msra.mxu0 0.0
    %676 = vmatpush.msra.mxu0 0.0
    %677 = vmatpush.msra.mxu0 0.0
    %678 = vmatpush.msra.mxu0 0.0
    %679 = vmatpush.msra.mxu0 0.0
    %680 = vmatpush.msra.mxu0 0.0
    %681 = vmatpush.msra.mxu0 0.0
    %682 = vmatpush.msra.mxu0 0.0
    %683 = vmatpush.msra.mxu0 0.0
    %684 = vmatpush.msra.mxu0 0.0
    %685 = vmatpush.msra.mxu0 0.0
    %686 = vmatpush.msra.mxu0 0.0
    %687 = vmatpush.msra.mxu0 0.0
    %688 = vmatpush.msra.mxu0 0.0
    %689 = vmatpush.msra.mxu0 %v669
    %690 = vmatmul.f32.gmra.mxu0 %v672
    %v691 = vpop.f32.mrf.mxu0
    %v692 = vadd.f32 0.0, %v691
    %693 = vdwg.mxu0
    %694 = vrot.lane.b32.xlu0 %v106, 40
    %v695 = vpop.permute.xlu0 %694
    %v698 = vsel %vm115, %v667, 0
    %700 = vmatpush.msra.mxu0 0.0
    %701 = vmatpush.msra.mxu0 0.0
    %702 = vmatpush.msra.mxu0 0.0
    %703 = vmatpush.msra.mxu0 0.0
    %704 = vmatpush.msra.mxu0 0.0
    %705 = vmatpush.msra.mxu0 0.0
    %706 = vmatpush.msra.mxu0 0.0
    %707 = vmatpush.msra.mxu0 0.0
    %708 = vmatpush.msra.mxu0 0.0
    %709 = vmatpush.msra.mxu0 0.0
    %710 = vmatpush.msra.mxu0 0.0
    %711 = vmatpush.msra.mxu0 0.0
    %712 = vmatpush.msra.mxu0 0.0
    %713 = vmatpush.msra.mxu0 0.0
    %714 = vmatpush.msra.mxu0 0.0
    %715 = vmatpush.msra.mxu0 %v695
    %716 = vmatmul.f32.gmra.mxu0 %v698
    %v717 = vpop.f32.mrf.mxu0
    %v718 = vadd.f32 0.0, %v717
    %719 = vdwg.mxu0
    %v721 = vsel %vm115, %v692, 0
    %v724 = vsel %vm115, %v718, 0
    %726 = vmatpush.msra.mxu0 0.0
    %727 = vmatpush.msra.mxu0 0.0
    %728 = vmatpush.msra.mxu0 0.0
    %729 = vmatpush.msra.mxu0 0.0
    %730 = vmatpush.msra.mxu0 0.0
    %731 = vmatpush.msra.mxu0 0.0
    %732 = vmatpush.msra.mxu0 0.0
    %733 = vmatpush.msra.mxu0 0.0
    %734 = vmatpush.msra.mxu0 0.0
    %735 = vmatpush.msra.mxu0 0.0
    %736 = vmatpush.msra.mxu0 0.0
    %737 = vmatpush.msra.mxu0 0.0
    %738 = vmatpush.msra.mxu0 0.0
    %739 = vmatpush.msra.mxu0 0.0
    %740 = vmatpush.msra.mxu0 0.0
    %741 = vmatpush.msra.mxu0 %v111
    %742 = vmatmul.f32.gmra.mxu0 %v721
    %v743 = vpop.f32.mrf.mxu0
    %v744 = vadd.f32 0.0, %v743
    %745 = vmatmul.f32.gmra.mxu0 %v724
    %v746 = vpop.f32.mrf.mxu0
    %v747 = vadd.f32 0.0, %v746
    %748 = vdwg.mxu0
    %v749 = vadd.f32 %v588, %v744
    %v750 = vadd.f32 %v589, %v747
    %v751 = vld [vmem:[%s4] sm:$0x1]
    %v753 = vperm.slane %v751, 0
    %v755 = vadd.f32 %v749, %v753
    %v756 = vadd.f32 %v750, %v753
    %757 = vst.msk [vmem:[#allocation8] sm:$0xff] %vm78, %v755
    %758 = vst.msk [vmem:[#allocation8 + $0x8] sm:$0xff] %vm78, %v756
    // Predicated region
    $region34: #{tpu_custom_call.1} parent=1 // pred_check
      _
    $region35: #{tpu_custom_call.1} parent=1 // pred_check_branch
      %760 = sbr.rel (0) target = $region37
    $region36: #{tpu_custom_call.1} parent=1 // pred_region
      %762 = vsyncadd [#allocation4], 0
      %s763 = sshll.u32 [#allocation8], 4
      %s764 = int_to_ptr.vmem [resolvable:$true] %s763
      %s765 = sshll.u32 %s5, 4
      %s766 = int_to_ptr.hbm [resolvable:$true] %s765
      %771 = dma.vmem_to_hbm [thread:$0]  %s764, 256, %s766, [#allocation4], 128, 128, 8
    $region37: #{tpu_custom_call.1} parent=1 // pred_fallthru
      _
    // Predicated region
    $region38: #{tpu_custom_call.1} parent=1 // pred_check
      _
    $region39: #{tpu_custom_call.1} parent=1 // pred_check_branch
      %773 = sbr.rel (0) target = $region41
    $region40: #{tpu_custom_call.1} parent=1 // pred_region
      %775 = dma.done [#allocation4], 256
    $region41: #{tpu_custom_call.1} parent=1 // pred_fallthru
      _
    %776 = vsyncpa [#allocation3], 1
    %777 = vsyncpa [#allocation6], 1
    %778 = vsyncpa [#allocation4], 1

</llo_original>
